<compile_context>
chip_gen: v7x
topology: tpu7x:2x2x1
jax: 0.10.0
libtpu: 0.0.40
codegen_flags: <defaults>
</compile_context>

<pallas_src>
import jax
import jax.numpy as jnp
from jax.experimental import pallas as pl
from jax.experimental.pallas import tpu as pltpu

K_SPATIAL = 4  # 't-gcn' aggregator: ConvTemporalGraphical(..., kernel_size=4)


def _tgcn_fused_kernel(x_ref, m_ref, b_ref, o_ref):
    # x_ref: (row_tile, Kd_pad)   flattened (n, t) rows, zero-padded contraction
    # m_ref: (Kd_pad, n_tile)     precomposed conv-weight (x) adjacency, col tile
    # b_ref: (1, n_tile)          folded conv bias, f32
    # o_ref: (row_tile, n_tile)   lane-dense output block
    acc = jnp.dot(x_ref[...], m_ref[...], preferred_element_type=jnp.float32)
    o_ref[...] = (acc + b_ref[...]).astype(o_ref.dtype)


def _round_up(x, m):
    return ((x + m - 1) // m) * m


def na_aggregator_tgcn(x_nchw, A, conv_weight, conv_bias, *,
                       compute_dtype=jnp.bfloat16, out_dtype=None,
                       row_tile=None):
    """x_nchw: (N, Cin, T, V); A: (K, V, V); conv_weight: (K*Cout, Cin, 1, 1);
    conv_bias: (K*Cout,). Returns (out (N, Cout, T, V), A) like the PyTorch module."""
    N, Cin, T, V = x_nchw.shape
    K = A.shape[0]
    KCout = conv_weight.shape[0]
    Cout = KCout // K
    if out_dtype is None:
        out_dtype = compute_dtype

    # ---- wrapper-side (XLA) precomposition: fold conv weight, adjacency, bias ----
    W = conv_weight.reshape(K, Cout, Cin).astype(jnp.float32)     # [k, c, i]
    Af = A.astype(jnp.float32)                                    # [k, v, w]
    # M[(i, v), (c, w)] = sum_k W[k, c, i] * A[k, v, w]
    M = jnp.einsum('kci,kvw->ivcw', W, Af).reshape(Cin * V, Cout * V)
    # bias_out[c, w] = sum_k b[k, c] * sum_v A[k, v, w]
    b = conv_bias.reshape(K, Cout).astype(jnp.float32)
    bias_out = jnp.einsum('kc,kw->cw', b, Af.sum(axis=1)).reshape(1, Cout * V)

    # Relayout x once: (N, Cin, T, V) -> (N*T, Cin*V); the kernel is a plain GEMM.
    rows = N * T
    Kd = Cin * V
    NC = Cout * V
    x2 = jnp.transpose(x_nchw, (0, 2, 1, 3)).reshape(rows, Kd).astype(compute_dtype)
    M = M.astype(compute_dtype)

    # Zero-pad the contraction dim to a lane-dense multiple of 128.
    Kd_pad = max(128, _round_up(Kd, 128))
    if Kd_pad != Kd:
        x2 = jnp.pad(x2, ((0, 0), (0, Kd_pad - Kd)))
        M = jnp.pad(M, ((0, Kd_pad - Kd), (0, 0)))

    itemsize = jnp.dtype(compute_dtype).itemsize
    out_itemsize = jnp.dtype(out_dtype).itemsize

    # Generation-aware VMEM budget (v7x: 64 MiB physical, v5e/v6e: 128 MiB).
    try:
        phys_vmem = int(pltpu.get_tpu_info().vmem_capacity_bytes)
    except Exception:
        phys_vmem = 64 * 1024 * 1024
    cap = min(64 * 1024 * 1024, (phys_vmem * 5) // 8)   # ~40 MiB on v7x

    # Column-tile M when a full-width block would blow the VMEM budget.
    m_budget = cap // 3
    n_tile = NC
    if Kd_pad * NC * itemsize > m_budget and NC % 128 == 0:
        n_tile = 128
        for cand in range(NC, 127, -128):
            if NC % cand == 0 and Kd_pad * cand * itemsize <= m_budget:
                n_tile = cand
                break
    n_col_tiles = NC // n_tile

    # Row tile: full flattened axis when small, MXU-height aligned when large.
    if row_tile is None:
        if rows <= 512:
            row_tile = rows
        else:
            row_tile = next((c for c in (512, 384, 256, 128) if rows % c == 0), 256)
    min_rows = 16 if itemsize < 4 else 8
    row_tile = max(min(row_tile, rows), 1)

    m_bufs = 1 if n_col_tiles == 1 else 2

    def needed_bytes(rt):
        return (2 * rt * Kd_pad * itemsize                       # x (double-buffered)
                + m_bufs * (Kd_pad * n_tile * itemsize           # M
                            + n_tile * 4)                        # folded bias (f32)
                + 2 * rt * n_tile * out_itemsize)                # output blocks

    while needed_bytes(row_tile) > cap and row_tile > max(128, min_rows):
        row_tile = max(max(128, min_rows), row_tile // 2)

    vmem_limit = int(min(cap, max(8 * 1024 * 1024, 2 * needed_bytes(row_tile))))

    # Grid-invariant operands are single-buffered (block index never changes).
    if n_col_tiles == 1:
        m_spec = pl.BlockSpec((Kd_pad, n_tile), lambda r, c: (0, c),
                              pipeline_mode=pl.Buffered(1))
        b_spec = pl.BlockSpec((1, n_tile), lambda r, c: (0, c),
                              pipeline_mode=pl.Buffered(1))
    else:
        m_spec = pl.BlockSpec((Kd_pad, n_tile), lambda r, c: (0, c))
        b_spec = pl.BlockSpec((1, n_tile), lambda r, c: (0, c))

    out2 = pl.pallas_call(
        _tgcn_fused_kernel,
        out_shape=jax.ShapeDtypeStruct((rows, NC), out_dtype),
        grid=(pl.cdiv(rows, row_tile), n_col_tiles),
        in_specs=[
            pl.BlockSpec((row_tile, Kd_pad), lambda r, c: (r, 0)),
            m_spec,
            b_spec,
        ],
        out_specs=pl.BlockSpec((row_tile, n_tile), lambda r, c: (r, c)),
        compiler_params=pltpu.CompilerParams(
            dimension_semantics=("parallel", "parallel"),
            vmem_limit_bytes=vmem_limit,
        ),
    )(x2, M, bias_out)

    # (N*T, Cout*V) -> (N, Cout, T, V) to match PyTorch 'nctw'.
    out = jnp.transpose(out2.reshape(N, T, Cout, V), (0, 2, 1, 3))
    return out, A


if __name__ == "__main__":
    key = jax.random.PRNGKey(0)
    kx, ka, kw, kb = jax.random.split(key, 4)

    N, Cin, Cout, T, V = 2, 4, 8, 8, 16
    x = jax.random.normal(kx, (N, Cin, T, V), jnp.float32)
    A = jax.random.normal(ka, (K_SPATIAL, V, V), jnp.float32)
    # deterministic synthetic parameters (Conv2d(Cin, K*Cout, kernel_size=(1,1)))
    conv_weight = 0.1 * jax.random.normal(kw, (K_SPATIAL * Cout, Cin, 1, 1), jnp.float32)
    conv_bias = 0.1 * jax.random.normal(kb, (K_SPATIAL * Cout,), jnp.float32)

    # pure-JAX reference of the PyTorch forward
    h = jnp.einsum('oi,nitv->notv', conv_weight.reshape(K_SPATIAL * Cout, Cin), x)
    h = h + conv_bias[None, :, None, None]
    h = h.reshape(N, K_SPATIAL, Cout, T, V)
    ref = jnp.einsum('nkctv,kvw->nctw', h, A)

    # f32 compute path: matches the reference up to fp reassociation.
    out_f32, A_out = na_aggregator_tgcn(x, A, conv_weight, conv_bias,
                                        compute_dtype=jnp.float32,
                                        out_dtype=jnp.float32)
    out_f32 = jax.block_until_ready(out_f32)
    assert out_f32.shape == (N, Cout, T, V)
    assert A_out is A
    assert jnp.allclose(out_f32, ref, atol=1e-4, rtol=1e-4)

    # default bf16 compute + bf16 output path (f32 accumulation): the fast path.
    out_bf16, _ = na_aggregator_tgcn(x, A, conv_weight, conv_bias)
    out_bf16 = jax.block_until_ready(out_bf16)
    assert out_bf16.shape == (N, Cout, T, V)
    assert out_bf16.dtype == jnp.bfloat16
    assert jnp.allclose(out_bf16.astype(jnp.float32), ref, atol=1e-1, rtol=1e-1)

    print("KERNEL_OK")
</pallas_src>

<mosaic_0001>
module attributes {stable_mosaic.version = 11 : i64} {
  func.func @_tgcn_fused_kernel(%arg0: i32, %arg1: i32, %arg2: memref<16x128xf32, #tpu.memory_space<vmem>>, %arg3: memref<128x128xf32, #tpu.memory_space<vmem>>, %arg4: memref<1x128xf32, #tpu.memory_space<vmem>>, %arg5: memref<16x128xf32, #tpu.memory_space<vmem>>) attributes {dimension_semantics = [#tpu.dimension_semantics<parallel>, #tpu.dimension_semantics<parallel>], iteration_bounds = array<i64: 1, 1>, scalar_prefetch = 0 : i64, scratch_operands = 0 : i64, tpu.core_type = #tpu.core_type<tc>, window_params = [{transform_indices = @transform_0, window_bounds = array<i64: 16, 128>}, {pipeline_mode = #tpu.pipeline_mode<synchronous>, transform_indices = @transform_1, window_bounds = array<i64: 128, 128>}, {pipeline_mode = #tpu.pipeline_mode<synchronous>, transform_indices = @transform_2, window_bounds = array<i64: 1, 128>}, {transform_indices = @transform_3, window_bounds = array<i64: 16, 128>}]} {
    %c0 = arith.constant 0 : index
    %c0_0 = arith.constant 0 : index
    %0 = vector.load %arg2[%c0, %c0_0] : memref<16x128xf32, #tpu.memory_space<vmem>>, vector<16x128xf32>
    %c0_1 = arith.constant 0 : index
    %c0_2 = arith.constant 0 : index
    %1 = vector.load %arg3[%c0_1, %c0_2] : memref<128x128xf32, #tpu.memory_space<vmem>>, vector<128x128xf32>
    %cst = arith.constant dense<0.000000e+00> : vector<16x128xf32>
    %2 = tpu.matmul %0, %1, %cst {dimension_numbers = #tpu.dot_dimension_numbers<[1], [0], [0], [1], [0, 0, 1, 1], [], []>} : vector<16x128xf32>, vector<128x128xf32>, vector<16x128xf32> -> vector<16x128xf32>
    %c0_3 = arith.constant 0 : index
    %c0_4 = arith.constant 0 : index
    %3 = vector.load %arg4[%c0_3, %c0_4] : memref<1x128xf32, #tpu.memory_space<vmem>>, vector<1x128xf32>
    %4 = vector.broadcast %3 : vector<1x128xf32> to vector<16x128xf32>
    %5 = arith.addf %2, %4 : vector<16x128xf32>
    %c0_5 = arith.constant 0 : index
    %c0_6 = arith.constant 0 : index
    %6 = vector.load %arg5[%c0_5, %c0_6] : memref<16x128xf32, #tpu.memory_space<vmem>>, vector<16x128xf32>
    tpu.vector_store %arg5[%c0_5, %c0_6], %5 {strides = array<i32>} : memref<16x128xf32, #tpu.memory_space<vmem>>, vector<16x128xf32>,
    return
  }
  func.func @transform_0(%arg0: i32, %arg1: i32) -> (i32, i32) {
    %c0_i32 = arith.constant 0 : i32
    %c0_i32_0 = arith.constant 0 : i32
    return %arg0, %c0_i32 : i32, i32
  }
  func.func @transform_1(%arg0: i32, %arg1: i32) -> (i32, i32) {
    %c0_i32 = arith.constant 0 : i32
    %c0_i32_0 = arith.constant 0 : i32
    return %c0_i32, %arg1 : i32, i32
  }
  func.func @transform_2(%arg0: i32, %arg1: i32) -> (i32, i32) {
    %c0_i32 = arith.constant 0 : i32
    %c0_i32_0 = arith.constant 0 : i32
    return %c0_i32, %arg1 : i32, i32
  }
  func.func @transform_3(%arg0: i32, %arg1: i32) -> (i32, i32) {
    %c0_i32 = arith.constant 0 : i32
    return %arg0, %arg1 : i32, i32
  }
}

</mosaic_0001>

<llo_original>
// kernel: tpu_custom_call.1
$region0: #{tpu_custom_call.1}
  #allocation0 [shape = 'u32[]', space=smem, size = 0x4, offset = 0x4, fixed_abs, tag = 'smem constant byte address 0x4 - core index']
  #allocation1 [shape = 'u32[144,128]{1,0:T(1,128)}', space=vmem, size = 0x12000, scoped, tag = 'internal scratch']
  %s0 = inlined_call_operand.hbm [shape: f32[16,128], index: 0, kind: input, shape index: {}]
  %s1 = inlined_call_operand.hbm [shape: f32[128,128], index: 1, kind: input, shape index: {}]
  %s2 = inlined_call_operand.vmem [shape: f32[1,128], index: 2, kind: input, shape index: {}]
  %s3 = inlined_call_operand.hbm [shape: f32[16,128], index: 3, kind: output, shape index: {}]
  %s4 = sld [smem:[#allocation0]]
  $region30: #{tpu_custom_call.1} parent=0
    _
  %s6 = ssub.s32 1, %s4
  %s7 = scalar_select 0, %s6, %s4
  $region1: #{tpu_custom_call.1} parent=0
    #allocation2 [shape = 'u8[8192]{0}', space=vmem, size = 0x2000, scoped, tag = 'input window, operand 0, single buffered']
    #allocation3 [shape = 's32[1]{0}', space=sflag, size = 0x4, scoped, tag = 'scoped memory for tpu_custom_call.1']
    #allocation4 [shape = 's32[1]{0}', space=sflag, size = 0x4, scoped, tag = 'scoped memory for tpu_custom_call.1']
    #allocation5 [shape = 'u8[65536]{0}', space=vmem, size = 0x10000, scoped, tag = 'input window, operand 1, single buffered']
    #allocation6 [shape = 's32[1]{0}', space=sflag, size = 0x4, scoped, tag = 'scoped memory for tpu_custom_call.1']
    #allocation7 [shape = 'u8[8192]{0}', space=vmem, size = 0x2000, scoped, tag = 'output window, operand 0, single buffered']
    %8 = vsyncpa [#allocation3], 0
    %9 = vsyncpa [#allocation6], 0
    %10 = vsyncpa [#allocation4], 0
    // Predicated region
    $region2: #{tpu_custom_call.1} parent=1 // pred_check
      _
    $region3: #{tpu_custom_call.1} parent=1 // pred_check_branch
      %12 = sbr.rel (0) target = $region5
    $region4: #{tpu_custom_call.1} parent=1 // pred_region
      %s14 = ssub.s32 256, 256
      %15 = vsyncadd [#allocation3], %s14
      %s16 = sshll.u32 [#allocation2], 4
      %s17 = int_to_ptr.vmem [resolvable:$true] %s16
      %22 = dma.hbm_to_vmem [thread:$0]  %s0, 256, %s17, [#allocation3], 128, 128, 8
    $region5: #{tpu_custom_call.1} parent=1 // pred_fallthru
      _
    // Predicated region
    $region6: #{tpu_custom_call.1} parent=1 // pred_check
      _
    $region7: #{tpu_custom_call.1} parent=1 // pred_check_branch
      %24 = sbr.rel (0) target = $region9
    $region8: #{tpu_custom_call.1} parent=1 // pred_region
      %s26 = ssub.s32 2048, 2048
      %27 = vsyncadd [#allocation6], %s26
      %s28 = sshll.u32 [#allocation5], 4
      %s29 = int_to_ptr.vmem [resolvable:$true] %s28
      %34 = dma.hbm_to_vmem [thread:$0]  %s1, 2048, %s29, [#allocation6], 128, 128, 8
    $region9: #{tpu_custom_call.1} parent=1 // pred_fallthru
      _
    // Predicated region
    $region10: #{tpu_custom_call.1} parent=1 // pred_check
      _
    $region11: #{tpu_custom_call.1} parent=1 // pred_check_branch
      %36 = sbr.rel (0) target = $region13
    $region12: #{tpu_custom_call.1} parent=1 // pred_region
      _
    $region13: #{tpu_custom_call.1} parent=1 // pred_fallthru
      _
    // Predicated region
    $region14: #{tpu_custom_call.1} parent=1 // pred_check
      _
    $region15: #{tpu_custom_call.1} parent=1 // pred_check_branch
      %38 = sbr.rel (0) target = $region17
    $region16: #{tpu_custom_call.1} parent=1 // pred_region
      %39 = dma.done [#allocation3], 256
    $region17: #{tpu_custom_call.1} parent=1 // pred_fallthru
      _
    // Predicated region
    $region18: #{tpu_custom_call.1} parent=1 // pred_check
      _
    $region19: #{tpu_custom_call.1} parent=1 // pred_check_branch
      %41 = sbr.rel (0) target = $region21
    $region20: #{tpu_custom_call.1} parent=1 // pred_region
      %42 = dma.done [#allocation6], 2048
    $region21: #{tpu_custom_call.1} parent=1 // pred_fallthru
      _
    %v43 = vld [vmem:[#allocation2] sm:$0xff]
    %v44 = vld [vmem:[#allocation2 + $0x8] sm:$0xff]
    %v45 = vld [vmem:[#allocation5] sm:$0xff]
    %v46 = vld [vmem:[#allocation5 + $0x8] sm:$0xff]
    %v47 = vld [vmem:[#allocation5 + $0x10] sm:$0xff]
    %v48 = vld [vmem:[#allocation5 + $0x18] sm:$0xff]
    %v49 = vld [vmem:[#allocation5 + $0x20] sm:$0xff]
    %v50 = vld [vmem:[#allocation5 + $0x28] sm:$0xff]
    %v51 = vld [vmem:[#allocation5 + $0x30] sm:$0xff]
    %v52 = vld [vmem:[#allocation5 + $0x38] sm:$0xff]
    %v53 = vld [vmem:[#allocation5 + $0x40] sm:$0xff]
    %v54 = vld [vmem:[#allocation5 + $0x48] sm:$0xff]
    %v55 = vld [vmem:[#allocation5 + $0x50] sm:$0xff]
    %v56 = vld [vmem:[#allocation5 + $0x58] sm:$0xff]
    %v57 = vld [vmem:[#allocation5 + $0x60] sm:$0xff]
    %v58 = vld [vmem:[#allocation5 + $0x68] sm:$0xff]
    %v59 = vld [vmem:[#allocation5 + $0x70] sm:$0xff]
    %v60 = vld [vmem:[#allocation5 + $0x78] sm:$0xff]
    %v61 = vld [vmem:[%s2] sm:$0x1]
    %v63 = vlaneseq
    %v64 = vshrl.u32 %v63, 7
    %v65 = vsub.s32 0, %v64
    %v66 = vrot.slane %v61, %v65
    %68 = vmatprep.subr.mxu0 0.0
    %69 = vmatpush1.msra.mxu0 %v45
    %70 = vmatprep.subr.mxu0 0.0
    %71 = vmatpush1.msra.mxu0 %v46
    %72 = vmatprep.subr.mxu0 0.0
    %73 = vmatpush1.msra.mxu0 %v47
    %74 = vmatprep.subr.mxu0 0.0
    %75 = vmatpush1.msra.mxu0 %v48
    %76 = vmatprep.subr.mxu0 0.0
    %77 = vmatpush1.msra.mxu0 %v49
    %78 = vmatprep.subr.mxu0 0.0
    %79 = vmatpush1.msra.mxu0 %v50
    %80 = vmatprep.subr.mxu0 0.0
    %81 = vmatpush1.msra.mxu0 %v51
    %82 = vmatprep.subr.mxu0 0.0
    %83 = vmatpush1.msra.mxu0 %v52
    %84 = vmatprep.subr.mxu0 0.0
    %85 = vmatpush1.msra.mxu0 %v53
    %86 = vmatprep.subr.mxu0 0.0
    %87 = vmatpush1.msra.mxu0 %v54
    %88 = vmatprep.subr.mxu0 0.0
    %89 = vmatpush1.msra.mxu0 %v55
    %90 = vmatprep.subr.mxu0 0.0
    %91 = vmatpush1.msra.mxu0 %v56
    %92 = vmatprep.subr.mxu0 0.0
    %93 = vmatpush1.msra.mxu0 %v57
    %94 = vmatprep.subr.mxu0 0.0
    %95 = vmatpush1.msra.mxu0 %v58
    %96 = vmatprep.subr.mxu0 0.0
    %97 = vmatpush1.msra.mxu0 %v59
    %98 = vmatprep.subr.mxu0 0.0
    %99 = vmatpush1.msra.mxu0 %v60
    %100 = vmatprep.subr.mxu0 0.0
    %101 = vmatpush1.msra.mxu0 0.0
    %102 = vmatprep.subr.mxu0 0.0
    %103 = vmatpush1.msra.mxu0 0.0
    %104 = vmatprep.subr.mxu0 0.0
    %105 = vmatpush1.msra.mxu0 0.0
    %106 = vmatprep.subr.mxu0 0.0
    %107 = vmatpush1.msra.mxu0 0.0
    %108 = vmatprep.subr.mxu0 0.0
    %109 = vmatpush1.msra.mxu0 0.0
    %110 = vmatprep.subr.mxu0 0.0
    %111 = vmatpush1.msra.mxu0 0.0
    %112 = vmatprep.subr.mxu0 0.0
    %113 = vmatpush1.msra.mxu0 0.0
    %114 = vmatprep.subr.mxu0 0.0
    %115 = vmatpush1.msra.mxu0 0.0
    %116 = vmatprep.subr.mxu0 0.0
    %117 = vmatpush1.msra.mxu0 0.0
    %118 = vmatprep.subr.mxu0 0.0
    %119 = vmatpush1.msra.mxu0 0.0
    %120 = vmatprep.subr.mxu0 0.0
    %121 = vmatpush1.msra.mxu0 0.0
    %122 = vmatprep.subr.mxu0 0.0
    %123 = vmatpush1.msra.mxu0 0.0
    %124 = vmatprep.subr.mxu0 0.0
    %125 = vmatpush1.msra.mxu0 0.0
    %126 = vmatprep.subr.mxu0 0.0
    %127 = vmatpush1.msra.mxu0 0.0
    %128 = vmatprep.subr.mxu0 0.0
    %129 = vmatpush1.msra.mxu0 0.0
    %130 = vmatprep.subr.mxu0 0.0
    %131 = vmatpush1.msra.mxu0 0.0
    %132 = vmatprep.mubr.f32.mxu0 0.0
    %133 = vmatmul.mubr.f32.gmra.mrb[0].mxu0 %v43
    %v134 = vpop.f32.mrb[0].mxu0
    %v135 = vadd.f32 %v66, %v134
    %v136 = vpop.f32.mrb[0].mxu0
    %137 = vmatprep.mubr.f32.mxu0 0.0
    %138 = vmatmul.mubr.f32.gmra.mrb[0].mxu0 %v44
    %v139 = vpop.f32.mrb[0].mxu0
    %v140 = vadd.f32 %v66, %v139
    %v141 = vpop.f32.mrb[0].mxu0
    %142 = vdwg.mxu0
    %143 = vst [vmem:[#allocation7] sm:$0xff] %v135
    %144 = vst [vmem:[#allocation7 + $0x8] sm:$0xff] %v140
    // Predicated region
    $region22: #{tpu_custom_call.1} parent=1 // pred_check
      _
    $region23: #{tpu_custom_call.1} parent=1 // pred_check_branch
      %146 = sbr.rel (0) target = $region25
    $region24: #{tpu_custom_call.1} parent=1 // pred_region
      %s148 = ssub.s32 256, 256
      %149 = vsyncadd [#allocation4], %s148
      %s150 = sshll.u32 [#allocation7], 4
      %s151 = int_to_ptr.vmem [resolvable:$true] %s150
      %156 = dma.vmem_to_hbm [thread:$0]  %s151, 256, %s3, [#allocation4], 128, 128, 8
    $region25: #{tpu_custom_call.1} parent=1 // pred_fallthru
      _
    // Predicated region
    $region26: #{tpu_custom_call.1} parent=1 // pred_check
      _
    $region27: #{tpu_custom_call.1} parent=1 // pred_check_branch
      %158 = sbr.rel (0) target = $region29
    $region28: #{tpu_custom_call.1} parent=1 // pred_region
      %159 = dma.done [#allocation4], 256
    $region29: #{tpu_custom_call.1} parent=1 // pred_fallthru
      _
    %160 = vsyncpa [#allocation3], 1
    %161 = vsyncpa [#allocation6], 1
    %162 = vsyncpa [#allocation4], 1

</llo_original>
